<compile_context>
chip_gen: v5e
topology: v5e:2x2
jax: 0.10.0
libtpu: 0.0.40
codegen_flags: <defaults>
</compile_context>

<pallas_src>
import functools

import numpy as np
import jax
import jax.numpy as jnp
from jax.experimental import pallas as pl
from jax.experimental.pallas import tpu as pltpu


# ----------------------------- shared math helpers ---------------------------

def _gelu_tanh(x):
    c = 0.7978845608028654  # sqrt(2/pi)
    return 0.5 * x * (1.0 + jnp.tanh(c * (x + 0.044715 * x * x * x)))


def _layer_norm(x, gamma, beta, eps=1e-5):
    mu = jnp.mean(x, axis=-1, keepdims=True)
    var = jnp.mean((x - mu) ** 2, axis=-1, keepdims=True)
    return (x - mu) * jax.lax.rsqrt(var + eps) * gamma + beta


# --------------------------------- the kernel --------------------------------

def _olinear_fft_kernel(x_ref, vecs_ref, g_t_ref, g_p_ref, g_dm_ref,
                        w_in_ref, wmix_ref, wc1_ref, wc2_ref, w2g_ref,
                        wf2_ref, o_ref, *, n_layers, ndm, ndff, nt, npred):
    f32 = jnp.float32
    x = x_ref[...]                               # (Bt, N*T) rows = batch elems
    vecs = vecs_ref[...]                         # packed channel-tiled vectors

    def vrow(r, d):
        return vecs[r:r + 1, :d]                 # static slice -> (1, d)

    # ---- RevIN 'norm': per-channel stats over time via group-avg matmuls ----
    g_t = g_t_ref[...]
    mu_t = jnp.dot(x, g_t, preferred_element_type=f32)          # (Bt, N*T)
    d = x - mu_t
    var_t = jnp.dot(d * d, g_t, preferred_element_type=f32)
    xn = d * jax.lax.rsqrt(var_t + 1e-5) * vrow(0, nt) + vrow(1, nt)

    # same per-channel stats broadcast at pred_len granularity (for denorm)
    g_p = g_p_ref[...]
    mu_p = jnp.dot(x, g_p, preferred_element_type=f32)          # (Bt, N*P)
    std_p = jnp.sqrt(jnp.dot(d * d, g_p, preferred_element_type=f32) + 1e-5)

    # ---- tokenEmb + rfft + first ortho Linear (+ fc1 residual path), fused ---
    hz = jnp.dot(xn, w_in_ref[...], preferred_element_type=f32)  # (Bt, ndm+ndff)
    h = hz[:, :ndm] + vrow(2, ndm)                               # (Bt, N*dm)
    xw = hz[:, ndm:]                                             # (Bt, N*dff)

    g_dm = g_dm_ref[...]

    def group_ln(z, gamma, beta):
        mu = jnp.dot(z, g_dm, preferred_element_type=f32)
        dz = z - mu
        var = jnp.dot(dz * dz, g_dm, preferred_element_type=f32)
        return dz * jax.lax.rsqrt(var + 1e-5) * gamma + beta

    # ---- Encoder_ori: LinearEncoder layers + final LayerNorm ----------------
    for l in range(n_layers):
        base = 3 + 6 * l
        # token mixing: z = h + softmax(wtok) mix, folded into one 128x128 matmul
        z = jnp.dot(h, wmix_ref[l], preferred_element_type=f32)
        h = group_ln(z, vrow(base + 0, ndm), vrow(base + 1, ndm))
        y = _gelu_tanh(jnp.dot(h, wc1_ref[l], preferred_element_type=f32)
                       + vrow(base + 2, ndff))
        z2 = h + jnp.dot(y, wc2_ref[l], preferred_element_type=f32) + vrow(base + 3, ndm)
        h = group_ln(z2, vrow(base + 4, ndm), vrow(base + 5, ndm))

    rg = 3 + 6 * n_layers
    h = group_ln(h, vrow(rg, ndm), vrow(rg + 1, ndm))

    # ---- fc head (second ortho Linear + irfft + residual + fc1/fc2, folded) --
    f1 = _gelu_tanh(jnp.dot(h, w2g_ref[...], preferred_element_type=f32)
                    + xw + vrow(rg + 2, ndff))
    op = jnp.dot(f1, wf2_ref[...], preferred_element_type=f32) + vrow(rg + 3, npred)

    # dropout (identity) + RevIN 'denorm'; lane-dense transposed store (N*P, Bt)
    res = (op - vrow(rg + 4, npred)) * vrow(rg + 5, npred) * std_p + mu_p
    o_ref[...] = res.T


# --------------------------------- wrapper ------------------------------------

class Config:
    seq_len = 8
    pred_len = 8
    enc_in = 4
    d_model = 32
    d_ff = 32
    embed_size = 4
    e_layers = 1
    dropout = 0.0
    activation = 'gelu'
    CKA_flag = False


def _block_rows(B, target_rows):
    round8 = lambda v: -(-v // 8) * 8
    if B <= 128:
        bp = round8(B)                       # single step, exact
        return bp, bp
    # multi-step: row block multiple of 128 (lane-dense transposed output),
    # and aim for >= 2 grid steps so v7x's two TensorCores both get work.
    bt = min(int(target_rows), -(-B // 2))
    bt = max(128, (bt // 128) * 128)
    bp = -(-B // bt) * bt
    return bt, bp


def olinear_fft_pallas(x, p, cfg, *, target_rows=2048):
    B, T, N = x.shape
    D, dm, dff = cfg.embed_size, cfg.d_model, cfg.d_ff
    P, L = cfg.pred_len, cfg.e_layers
    F = T // 2 + 1
    NT, NDM, NDFF, NP = N * T, N * dm, N * dff, N * P
    assert L >= 1

    Bt, Bp = _block_rows(B, target_rows)
    grid = (Bp // Bt,)

    f32 = jnp.float32
    eye_n = jnp.eye(N, dtype=f32)

    # ---- host-side constant folds (exact linear maps) -----------------------
    dft = np.fft.rfft(np.eye(T), axis=-1, norm='ortho')                   # (T, F) complex
    rfft_cat = jnp.asarray(np.concatenate([dft.real, dft.imag], axis=1), f32)  # (T, 2F)
    eye_f = np.eye(F)
    irfft_cat = jnp.asarray(np.concatenate(
        [np.fft.irfft(eye_f, n=T, axis=-1, norm='ortho'),
         np.fft.irfft(1j * eye_f, n=T, axis=-1, norm='ortho')], axis=0), f32)   # (2F, T)

    emb = p['emb'][0]                                                     # (D,)
    # tokenEmb + rfft folded into the first ortho_trans Linear.
    w1_eff = jnp.einsum('d,mdc->cm', emb, p['W1'].reshape(dm, D, 2 * F))  # (2F, dm)
    w_in = rfft_cat @ w1_eff                                              # (T, dm)

    # irfft + tokenEmb residual + fc1 folds.
    wf1r = p['Wf1'].reshape(dff, T, D)
    gfold = jnp.einsum('ct,htd->dch', irfft_cat, wf1r).reshape(D * 2 * F, dff)
    wf1e = jnp.einsum('d,htd->th', emb, wf1r)                             # (T, dff)
    w2g = p['W2'].T @ gfold                                               # (dm, dff)
    bf1p = p['bf1'] + p['b2'] @ gfold                                     # (dff,)

    # kron-expanded per-channel weights: constant-size lane-dense matmuls.
    w_in_big = jnp.concatenate([jnp.kron(eye_n, w_in),
                                jnp.kron(eye_n, wf1e)], axis=1)           # (NT, NDM+NDFF)
    w2g_big = jnp.kron(eye_n, w2g)                                        # (NDM, NDFF)
    wf2_big = jnp.kron(eye_n, p['Wf2'].T)                                 # (NDFF, NP)

    wtok_soft = jax.nn.softmax(p['wtok'], axis=-1)                        # (L, N, N)
    eye_dm = jnp.eye(dm, dtype=f32)
    wmix = jnp.stack([jnp.eye(NDM, dtype=f32)
                      + jnp.kron(wtok_soft[l].T, eye_dm) for l in range(L)], 0)
    wc1b = jnp.stack([jnp.kron(eye_n, p['wc1'][l].T) for l in range(L)], 0)
    wc2b = jnp.stack([jnp.kron(eye_n, p['wc2'][l].T) for l in range(L)], 0)

    # group-average matrices for RevIN / LayerNorm statistics.
    g_t = jnp.kron(eye_n, jnp.full((T, T), 1.0 / T, f32))                 # (NT, NT)
    g_p = jnp.kron(eye_n, jnp.full((T, P), 1.0 / T, f32))                 # (NT, NP)
    g_dm = jnp.kron(eye_n, jnp.full((dm, dm), 1.0 / dm, f32))             # (NDM, NDM)

    # small per-feature vectors, channel-tiled, packed into one (NV, 128) array.
    W_pack = max(NDM, NDFF, NT, NP)

    def row(v, d):
        v = jnp.asarray(v, f32).reshape(-1)
        return jnp.pad(v, (0, W_pack - d))

    rows = [row(jnp.repeat(p['rev_w'], T), NT),
            row(jnp.repeat(p['rev_b'], T), NT),
            row(jnp.tile(p['b1'], N), NDM)]
    for l in range(L):
        rows += [row(jnp.tile(p['g1'][l], N), NDM), row(jnp.tile(p['be1'][l], N), NDM),
                 row(jnp.tile(p['bc1'][l], N), NDFF), row(jnp.tile(p['bc2'][l], N), NDM),
                 row(jnp.tile(p['g2'][l], N), NDM), row(jnp.tile(p['be2'][l], N), NDM)]
    rows += [row(jnp.tile(p['gf'], N), NDM), row(jnp.tile(p['bef'], N), NDM),
             row(jnp.tile(bf1p, N), NDFF), row(jnp.tile(p['bf2'], N), NP),
             row(jnp.repeat(p['rev_b'], P), NP),
             row(jnp.repeat(1.0 / (p['rev_w'] + 1e-10), P), NP)]
    vecs = jnp.stack(rows, axis=0)                                        # (9+6L, 128)

    # input as a contiguous (Bp, N*T) slab, zero-padded rows sliced away later.
    x_pack = jnp.transpose(x, (0, 2, 1)).reshape(B, NT).astype(f32)
    if Bp != B:
        x_pack = jnp.pad(x_pack, ((0, Bp - B), (0, 0)))

    inputs = [x_pack, vecs, g_t, g_p, g_dm, w_in_big, wmix, wc1b, wc2b,
              w2g_big, wf2_big]

    def const_spec(a):
        return pl.BlockSpec(a.shape, lambda b, _nd=a.ndim: (0,) * _nd)

    in_specs = ([pl.BlockSpec((Bt, NT), lambda b: (b, 0))]
                + [const_spec(a) for a in inputs[1:]])

    out_t = pl.pallas_call(
        functools.partial(_olinear_fft_kernel, n_layers=L, ndm=NDM, ndff=NDFF,
                          nt=NT, npred=NP),
        out_shape=jax.ShapeDtypeStruct((NP, Bp), f32),
        grid_spec=pltpu.PrefetchScalarGridSpec(
            num_scalar_prefetch=0,
            grid=grid,
            in_specs=in_specs,
            out_specs=pl.BlockSpec((NP, Bt), lambda b: (0, b))),
        compiler_params=pltpu.CompilerParams(dimension_semantics=("parallel",)),
    )(*inputs)

    out = out_t[:, :B].T.reshape(B, N, P)
    return jnp.transpose(out, (0, 2, 1))                                  # (B, pred_len, N)


# --------------------------- pure-JAX reference -------------------------------

def olinear_fft_reference(x, p, cfg):
    B, T, N = x.shape
    D, dm, dff = cfg.embed_size, cfg.d_model, cfg.d_ff
    P, L = cfg.pred_len, cfg.e_layers
    F = T // 2 + 1

    mean = jnp.mean(x, axis=1, keepdims=True)
    std = jnp.sqrt(jnp.var(x, axis=1, keepdims=True) + 1e-5)
    xn = (x - mean) / std * p['rev_w'] + p['rev_b']                      # (B,T,N)
    xe = jnp.transpose(xn, (0, 2, 1))[..., None] * p['emb'][0]           # (B,N,T,D)

    xt = jnp.transpose(xe, (0, 1, 3, 2))                                 # (B,N,D,T)
    xf = jnp.fft.rfft(xt, axis=-1, norm='ortho')
    xtr = jnp.concatenate([jnp.real(xf), jnp.imag(xf)], axis=-1)         # (B,N,D,2F)
    h = xtr.reshape(B, N, D * 2 * F) @ p['W1'].T + p['b1']
    for l in range(L):
        w = jax.nn.softmax(p['wtok'][l], axis=-1)
        attn = jnp.einsum('mn,bnd->bmd', w, h)
        h = _layer_norm(h + attn, p['g1'][l], p['be1'][l])
        y = _gelu_tanh(h @ p['wc1'][l].T + p['bc1'][l])
        y = y @ p['wc2'][l].T + p['bc2'][l]
        h = _layer_norm(h + y, p['g2'][l], p['be2'][l])
    h = _layer_norm(h, p['gf'], p['bef'])
    of = h @ p['W2'].T + p['b2']
    ofr = of.reshape(B, N, D, 2 * F)
    rec = jnp.fft.irfft(ofr[..., :F] + 1j * ofr[..., F:], n=T, axis=-1, norm='ortho')
    z = jnp.transpose(rec, (0, 1, 3, 2)) + xe                            # (B,N,T,D)
    f1 = _gelu_tanh(z.reshape(B, N, T * D) @ p['Wf1'].T + p['bf1'])
    op = f1 @ p['Wf2'].T + p['bf2']                                      # (B,N,P)
    out = jnp.transpose(op, (0, 2, 1))                                   # (B,P,N)
    return (out - p['rev_b']) / (p['rev_w'] + 1e-10) * std + mean


# --------------------------- deterministic params -----------------------------

def init_params(cfg, key):
    T, N, D = cfg.seq_len, cfg.enc_in, cfg.embed_size
    dm, dff, P, L = cfg.d_model, cfg.d_ff, cfg.pred_len, cfg.e_layers
    F = T // 2 + 1
    in1 = F * D * 2

    keys = iter(jax.random.split(key, 24))

    def lin(k, out_dim, in_dim):
        lim = 1.0 / np.sqrt(in_dim)
        return jax.random.uniform(k, (out_dim, in_dim), jnp.float32, -lim, lim)

    def vec(k, dim, scale=0.1):
        return scale * jax.random.normal(k, (dim,), jnp.float32)

    p = {}
    p['emb'] = jax.random.normal(next(keys), (1, D), jnp.float32)
    p['rev_w'] = 1.0 + 0.1 * jax.random.normal(next(keys), (N,), jnp.float32)
    p['rev_b'] = vec(next(keys), N)
    p['W1'] = lin(next(keys), dm, in1)
    p['b1'] = vec(next(keys), dm)
    p['wtok'] = jax.random.normal(next(keys), (L, N, N), jnp.float32) / np.sqrt(N)
    lim1, lim2 = 1.0 / np.sqrt(dm), 1.0 / np.sqrt(dff)
    p['wc1'] = jax.random.uniform(next(keys), (L, dff, dm), jnp.float32, -lim1, lim1)
    p['bc1'] = jax.random.uniform(next(keys), (L, dff), jnp.float32, -lim1, lim1)
    p['wc2'] = jax.random.uniform(next(keys), (L, dm, dff), jnp.float32, -lim2, lim2)
    p['bc2'] = jax.random.uniform(next(keys), (L, dm), jnp.float32, -lim2, lim2)
    p['g1'] = jnp.ones((L, dm), jnp.float32)
    p['be1'] = jnp.zeros((L, dm), jnp.float32)
    p['g2'] = jnp.ones((L, dm), jnp.float32)
    p['be2'] = jnp.zeros((L, dm), jnp.float32)
    p['gf'] = jnp.ones((dm,), jnp.float32)
    p['bef'] = jnp.zeros((dm,), jnp.float32)
    p['W2'] = lin(next(keys), in1, dm)
    p['b2'] = vec(next(keys), in1)
    p['Wf1'] = lin(next(keys), dff, T * D)
    p['bf1'] = vec(next(keys), dff)
    p['Wf2'] = lin(next(keys), P, dff)
    p['bf2'] = vec(next(keys), P)
    return p


# ------------------------------------ main -------------------------------------

if __name__ == "__main__":
    cfg = Config()
    key = jax.random.PRNGKey(0)
    kx, kx2, kp = jax.random.split(key, 3)
    params = init_params(cfg, kp)

    # small batch: single grid step (rows padded to a sublane multiple)
    x = jax.random.normal(kx, (2, cfg.seq_len, cfg.enc_in), jnp.float32)
    y = jax.block_until_ready(olinear_fft_pallas(x, params, cfg))
    assert y.shape == (2, cfg.pred_len, cfg.enc_in), y.shape
    y_ref = jax.block_until_ready(olinear_fft_reference(x, params, cfg))
    err = float(jnp.max(jnp.abs(y - y_ref)))
    assert err < 1e-2, f"mismatch vs reference (small batch): max abs err = {err}"

    # larger batch: exercises the multi-step grid (128-row blocks) + padding
    x2 = jax.random.normal(kx2, (300, cfg.seq_len, cfg.enc_in), jnp.float32)
    y2 = jax.block_until_ready(olinear_fft_pallas(x2, params, cfg))
    assert y2.shape == (300, cfg.pred_len, cfg.enc_in), y2.shape
    y2_ref = jax.block_until_ready(olinear_fft_reference(x2, params, cfg))
    err2 = float(jnp.max(jnp.abs(y2 - y2_ref)))
    assert err2 < 1e-2, f"mismatch vs reference (large batch): max abs err = {err2}"

    print("KERNEL_OK")
</pallas_src>

<mosaic_0001>
module attributes {stable_mosaic.version = 11 : i64} {
  func.func @_olinear_fft_kernel(%arg0: i32, %arg1: memref<8x32xf32, #tpu.memory_space<vmem>>, %arg2: memref<15x128xf32, #tpu.memory_space<vmem>>, %arg3: memref<32x32xf32, #tpu.memory_space<vmem>>, %arg4: memref<32x32xf32, #tpu.memory_space<vmem>>, %arg5: memref<128x128xf32, #tpu.memory_space<vmem>>, %arg6: memref<32x256xf32, #tpu.memory_space<vmem>>, %arg7: memref<1x128x128xf32, #tpu.memory_space<vmem>>, %arg8: memref<1x128x128xf32, #tpu.memory_space<vmem>>, %arg9: memref<1x128x128xf32, #tpu.memory_space<vmem>>, %arg10: memref<128x128xf32, #tpu.memory_space<vmem>>, %arg11: memref<128x32xf32, #tpu.memory_space<vmem>>, %arg12: memref<32x8xf32, #tpu.memory_space<vmem>>) attributes {dimension_semantics = [#tpu.dimension_semantics<parallel>], iteration_bounds = array<i64: 1>, scalar_prefetch = 0 : i64, scratch_operands = 0 : i64, tpu.core_type = #tpu.core_type<tc>, window_params = [{transform_indices = @transform_0, window_bounds = array<i64: 8, 32>}, {pipeline_mode = #tpu.pipeline_mode<synchronous>, transform_indices = @transform_1, window_bounds = array<i64: 15, 128>}, {pipeline_mode = #tpu.pipeline_mode<synchronous>, transform_indices = @transform_2, window_bounds = array<i64: 32, 32>}, {pipeline_mode = #tpu.pipeline_mode<synchronous>, transform_indices = @transform_3, window_bounds = array<i64: 32, 32>}, {pipeline_mode = #tpu.pipeline_mode<synchronous>, transform_indices = @transform_4, window_bounds = array<i64: 128, 128>}, {pipeline_mode = #tpu.pipeline_mode<synchronous>, transform_indices = @transform_5, window_bounds = array<i64: 32, 256>}, {pipeline_mode = #tpu.pipeline_mode<synchronous>, transform_indices = @transform_6, window_bounds = array<i64: 1, 128, 128>}, {pipeline_mode = #tpu.pipeline_mode<synchronous>, transform_indices = @transform_7, window_bounds = array<i64: 1, 128, 128>}, {pipeline_mode = #tpu.pipeline_mode<synchronous>, transform_indices = @transform_8, window_bounds = array<i64: 1, 128, 128>}, {pipeline_mode = #tpu.pipeline_mode<synchronous>, transform_indices = @transform_9, window_bounds = array<i64: 128, 128>}, {pipeline_mode = #tpu.pipeline_mode<synchronous>, transform_indices = @transform_10, window_bounds = array<i64: 128, 32>}, {transform_indices = @transform_11, window_bounds = array<i64: 32, 8>}]} {
    %c0 = arith.constant 0 : index
    %c0_0 = arith.constant 0 : index
    %0 = vector.load %arg1[%c0, %c0_0] : memref<8x32xf32, #tpu.memory_space<vmem>>, vector<8x32xf32>
    %c0_1 = arith.constant 0 : index
    %c0_2 = arith.constant 0 : index
    %1 = vector.load %arg2[%c0_1, %c0_2] : memref<15x128xf32, #tpu.memory_space<vmem>>, vector<15x128xf32>
    %c0_3 = arith.constant 0 : index
    %c0_4 = arith.constant 0 : index
    %2 = vector.load %arg3[%c0_3, %c0_4] : memref<32x32xf32, #tpu.memory_space<vmem>>, vector<32x32xf32>
    %cst = arith.constant dense<0.000000e+00> : vector<8x32xf32>
    %3 = tpu.matmul %0, %2, %cst {dimension_numbers = #tpu.dot_dimension_numbers<[1], [0], [0], [1], [0, 0, 1, 1], [], []>} : vector<8x32xf32>, vector<32x32xf32>, vector<8x32xf32> -> vector<8x32xf32>
    %4 = arith.subf %0, %3 : vector<8x32xf32>
    %5 = arith.mulf %4, %4 : vector<8x32xf32>
    %cst_5 = arith.constant dense<0.000000e+00> : vector<8x32xf32>
    %6 = tpu.matmul %5, %2, %cst_5 {dimension_numbers = #tpu.dot_dimension_numbers<[1], [0], [0], [1], [0, 0, 1, 1], [], []>} : vector<8x32xf32>, vector<32x32xf32>, vector<8x32xf32> -> vector<8x32xf32>
    %cst_6 = arith.constant 9.99999974E-6 : f32
    %7 = vector.broadcast %cst_6 : f32 to vector<8x32xf32>
    %8 = arith.addf %6, %7 : vector<8x32xf32>
    %9 = math.rsqrt %8 : vector<8x32xf32>
    %10 = arith.mulf %4, %9 : vector<8x32xf32>
    %11 = vector.extract_strided_slice %1 {offsets = [0, 0], sizes = [1, 32], strides = [1, 1]} : vector<15x128xf32> to vector<1x32xf32>
    %12 = vector.broadcast %11 : vector<1x32xf32> to vector<8x32xf32>
    %13 = arith.mulf %10, %12 : vector<8x32xf32>
    %14 = vector.extract_strided_slice %1 {offsets = [1, 0], sizes = [1, 32], strides = [1, 1]} : vector<15x128xf32> to vector<1x32xf32>
    %15 = vector.broadcast %14 : vector<1x32xf32> to vector<8x32xf32>
    %16 = arith.addf %13, %15 : vector<8x32xf32>
    %c0_7 = arith.constant 0 : index
    %c0_8 = arith.constant 0 : index
    %17 = vector.load %arg4[%c0_7, %c0_8] : memref<32x32xf32, #tpu.memory_space<vmem>>, vector<32x32xf32>
    %cst_9 = arith.constant dense<0.000000e+00> : vector<8x32xf32>
    %18 = tpu.matmul %0, %17, %cst_9 {dimension_numbers = #tpu.dot_dimension_numbers<[1], [0], [0], [1], [0, 0, 1, 1], [], []>} : vector<8x32xf32>, vector<32x32xf32>, vector<8x32xf32> -> vector<8x32xf32>
    %19 = arith.mulf %4, %4 : vector<8x32xf32>
    %cst_10 = arith.constant dense<0.000000e+00> : vector<8x32xf32>
    %20 = tpu.matmul %19, %17, %cst_10 {dimension_numbers = #tpu.dot_dimension_numbers<[1], [0], [0], [1], [0, 0, 1, 1], [], []>} : vector<8x32xf32>, vector<32x32xf32>, vector<8x32xf32> -> vector<8x32xf32>
    %cst_11 = arith.constant 9.99999974E-6 : f32
    %21 = vector.broadcast %cst_11 : f32 to vector<8x32xf32>
    %22 = arith.addf %20, %21 : vector<8x32xf32>
    %23 = math.sqrt %22 : vector<8x32xf32>
    %c0_12 = arith.constant 0 : index
    %c0_13 = arith.constant 0 : index
    %24 = vector.load %arg6[%c0_12, %c0_13] : memref<32x256xf32, #tpu.memory_space<vmem>>, vector<32x256xf32>
    %cst_14 = arith.constant dense<0.000000e+00> : vector<8x256xf32>
    %25 = tpu.matmul %16, %24, %cst_14 {dimension_numbers = #tpu.dot_dimension_numbers<[1], [0], [0], [1], [0, 0, 1, 1], [], []>} : vector<8x32xf32>, vector<32x256xf32>, vector<8x256xf32> -> vector<8x256xf32>
    %26 = vector.extract_strided_slice %25 {offsets = [0, 0], sizes = [8, 128], strides = [1, 1]} : vector<8x256xf32> to vector<8x128xf32>
    %27 = vector.extract_strided_slice %1 {offsets = [2, 0], sizes = [1, 128], strides = [1, 1]} : vector<15x128xf32> to vector<1x128xf32>
    %28 = vector.broadcast %27 : vector<1x128xf32> to vector<8x128xf32>
    %29 = arith.addf %26, %28 : vector<8x128xf32>
    %30 = vector.extract_strided_slice %25 {offsets = [0, 128], sizes = [8, 128], strides = [1, 1]} : vector<8x256xf32> to vector<8x128xf32>
    %c0_15 = arith.constant 0 : index
    %c0_16 = arith.constant 0 : index
    %31 = vector.load %arg5[%c0_15, %c0_16] : memref<128x128xf32, #tpu.memory_space<vmem>>, vector<128x128xf32>
    %c0_17 = arith.constant 0 : index
    %c0_18 = arith.constant 0 : index
    %c0_19 = arith.constant 0 : index
    %32 = vector.load %arg7[%c0_17, %c0_18, %c0_19] : memref<1x128x128xf32, #tpu.memory_space<vmem>>, vector<1x128x128xf32>
    %33 = vector.shape_cast %32 : vector<1x128x128xf32> to vector<128x128xf32>
    %cst_20 = arith.constant dense<0.000000e+00> : vector<8x128xf32>
    %34 = tpu.matmul %29, %33, %cst_20 {dimension_numbers = #tpu.dot_dimension_numbers<[1], [0], [0], [1], [0, 0, 1, 1], [], []>} : vector<8x128xf32>, vector<128x128xf32>, vector<8x128xf32> -> vector<8x128xf32>
    %35 = vector.extract_strided_slice %1 {offsets = [3, 0], sizes = [1, 128], strides = [1, 1]} : vector<15x128xf32> to vector<1x128xf32>
    %36 = vector.extract_strided_slice %1 {offsets = [4, 0], sizes = [1, 128], strides = [1, 1]} : vector<15x128xf32> to vector<1x128xf32>
    %cst_21 = arith.constant dense<0.000000e+00> : vector<8x128xf32>
    %37 = tpu.matmul %34, %31, %cst_21 {dimension_numbers = #tpu.dot_dimension_numbers<[1], [0], [0], [1], [0, 0, 1, 1], [], []>} : vector<8x128xf32>, vector<128x128xf32>, vector<8x128xf32> -> vector<8x128xf32>
    %38 = arith.subf %34, %37 : vector<8x128xf32>
    %39 = arith.mulf %38, %38 : vector<8x128xf32>
    %cst_22 = arith.constant dense<0.000000e+00> : vector<8x128xf32>
    %40 = tpu.matmul %39, %31, %cst_22 {dimension_numbers = #tpu.dot_dimension_numbers<[1], [0], [0], [1], [0, 0, 1, 1], [], []>} : vector<8x128xf32>, vector<128x128xf32>, vector<8x128xf32> -> vector<8x128xf32>
    %cst_23 = arith.constant 9.99999974E-6 : f32
    %41 = vector.broadcast %cst_23 : f32 to vector<8x128xf32>
    %42 = arith.addf %40, %41 : vector<8x128xf32>
    %43 = math.rsqrt %42 : vector<8x128xf32>
    %44 = arith.mulf %38, %43 : vector<8x128xf32>
    %45 = vector.broadcast %35 : vector<1x128xf32> to vector<8x128xf32>
    %46 = arith.mulf %44, %45 : vector<8x128xf32>
    %47 = vector.broadcast %36 : vector<1x128xf32> to vector<8x128xf32>
    %48 = arith.addf %46, %47 : vector<8x128xf32>
    %c0_24 = arith.constant 0 : index
    %c0_25 = arith.constant 0 : index
    %c0_26 = arith.constant 0 : index
    %49 = vector.load %arg8[%c0_24, %c0_25, %c0_26] : memref<1x128x128xf32, #tpu.memory_space<vmem>>, vector<1x128x128xf32>
    %50 = vector.shape_cast %49 : vector<1x128x128xf32> to vector<128x128xf32>
    %cst_27 = arith.constant dense<0.000000e+00> : vector<8x128xf32>
    %51 = tpu.matmul %48, %50, %cst_27 {dimension_numbers = #tpu.dot_dimension_numbers<[1], [0], [0], [1], [0, 0, 1, 1], [], []>} : vector<8x128xf32>, vector<128x128xf32>, vector<8x128xf32> -> vector<8x128xf32>
    %52 = vector.extract_strided_slice %1 {offsets = [5, 0], sizes = [1, 128], strides = [1, 1]} : vector<15x128xf32> to vector<1x128xf32>
    %53 = vector.broadcast %52 : vector<1x128xf32> to vector<8x128xf32>
    %54 = arith.addf %51, %53 : vector<8x128xf32>
    %cst_28 = arith.constant 5.000000e-01 : f32
    %55 = vector.broadcast %cst_28 : f32 to vector<8x128xf32>
    %56 = arith.mulf %55, %54 : vector<8x128xf32>
    %cst_29 = arith.constant 4.471500e-02 : f32
    %57 = vector.broadcast %cst_29 : f32 to vector<8x128xf32>
    %58 = arith.mulf %57, %54 : vector<8x128xf32>
    %59 = arith.mulf %58, %54 : vector<8x128xf32>
    %60 = arith.mulf %59, %54 : vector<8x128xf32>
    %61 = arith.addf %54, %60 : vector<8x128xf32>
    %cst_30 = arith.constant 0.797884583 : f32
    %62 = vector.broadcast %cst_30 : f32 to vector<8x128xf32>
    %63 = arith.mulf %62, %61 : vector<8x128xf32>
    %64 = math.tanh %63 : vector<8x128xf32>
    %cst_31 = arith.constant 1.000000e+00 : f32
    %65 = vector.broadcast %cst_31 : f32 to vector<8x128xf32>
    %66 = arith.addf %65, %64 : vector<8x128xf32>
    %67 = arith.mulf %56, %66 : vector<8x128xf32>
    %c0_32 = arith.constant 0 : index
    %c0_33 = arith.constant 0 : index
    %c0_34 = arith.constant 0 : index
    %68 = vector.load %arg9[%c0_32, %c0_33, %c0_34] : memref<1x128x128xf32, #tpu.memory_space<vmem>>, vector<1x128x128xf32>
    %69 = vector.shape_cast %68 : vector<1x128x128xf32> to vector<128x128xf32>
    %cst_35 = arith.constant dense<0.000000e+00> : vector<8x128xf32>
    %70 = tpu.matmul %67, %69, %cst_35 {dimension_numbers = #tpu.dot_dimension_numbers<[1], [0], [0], [1], [0, 0, 1, 1], [], []>} : vector<8x128xf32>, vector<128x128xf32>, vector<8x128xf32> -> vector<8x128xf32>
    %71 = arith.addf %48, %70 : vector<8x128xf32>
    %72 = vector.extract_strided_slice %1 {offsets = [6, 0], sizes = [1, 128], strides = [1, 1]} : vector<15x128xf32> to vector<1x128xf32>
    %73 = vector.broadcast %72 : vector<1x128xf32> to vector<8x128xf32>
    %74 = arith.addf %71, %73 : vector<8x128xf32>
    %75 = vector.extract_strided_slice %1 {offsets = [7, 0], sizes = [1, 128], strides = [1, 1]} : vector<15x128xf32> to vector<1x128xf32>
    %76 = vector.extract_strided_slice %1 {offsets = [8, 0], sizes = [1, 128], strides = [1, 1]} : vector<15x128xf32> to vector<1x128xf32>
    %cst_36 = arith.constant dense<0.000000e+00> : vector<8x128xf32>
    %77 = tpu.matmul %74, %31, %cst_36 {dimension_numbers = #tpu.dot_dimension_numbers<[1], [0], [0], [1], [0, 0, 1, 1], [], []>} : vector<8x128xf32>, vector<128x128xf32>, vector<8x128xf32> -> vector<8x128xf32>
    %78 = arith.subf %74, %77 : vector<8x128xf32>
    %79 = arith.mulf %78, %78 : vector<8x128xf32>
    %cst_37 = arith.constant dense<0.000000e+00> : vector<8x128xf32>
    %80 = tpu.matmul %79, %31, %cst_37 {dimension_numbers = #tpu.dot_dimension_numbers<[1], [0], [0], [1], [0, 0, 1, 1], [], []>} : vector<8x128xf32>, vector<128x128xf32>, vector<8x128xf32> -> vector<8x128xf32>
    %cst_38 = arith.constant 9.99999974E-6 : f32
    %81 = vector.broadcast %cst_38 : f32 to vector<8x128xf32>
    %82 = arith.addf %80, %81 : vector<8x128xf32>
    %83 = math.rsqrt %82 : vector<8x128xf32>
    %84 = arith.mulf %78, %83 : vector<8x128xf32>
    %85 = vector.broadcast %75 : vector<1x128xf32> to vector<8x128xf32>
    %86 = arith.mulf %84, %85 : vector<8x128xf32>
    %87 = vector.broadcast %76 : vector<1x128xf32> to vector<8x128xf32>
    %88 = arith.addf %86, %87 : vector<8x128xf32>
    %89 = vector.extract_strided_slice %1 {offsets = [9, 0], sizes = [1, 128], strides = [1, 1]} : vector<15x128xf32> to vector<1x128xf32>
    %90 = vector.extract_strided_slice %1 {offsets = [10, 0], sizes = [1, 128], strides = [1, 1]} : vector<15x128xf32> to vector<1x128xf32>
    %cst_39 = arith.constant dense<0.000000e+00> : vector<8x128xf32>
    %91 = tpu.matmul %88, %31, %cst_39 {dimension_numbers = #tpu.dot_dimension_numbers<[1], [0], [0], [1], [0, 0, 1, 1], [], []>} : vector<8x128xf32>, vector<128x128xf32>, vector<8x128xf32> -> vector<8x128xf32>
    %92 = arith.subf %88, %91 : vector<8x128xf32>
    %93 = arith.mulf %92, %92 : vector<8x128xf32>
    %cst_40 = arith.constant dense<0.000000e+00> : vector<8x128xf32>
    %94 = tpu.matmul %93, %31, %cst_40 {dimension_numbers = #tpu.dot_dimension_numbers<[1], [0], [0], [1], [0, 0, 1, 1], [], []>} : vector<8x128xf32>, vector<128x128xf32>, vector<8x128xf32> -> vector<8x128xf32>
    %cst_41 = arith.constant 9.99999974E-6 : f32
    %95 = vector.broadcast %cst_41 : f32 to vector<8x128xf32>
    %96 = arith.addf %94, %95 : vector<8x128xf32>
    %97 = math.rsqrt %96 : vector<8x128xf32>
    %98 = arith.mulf %92, %97 : vector<8x128xf32>
    %99 = vector.broadcast %89 : vector<1x128xf32> to vector<8x128xf32>
    %100 = arith.mulf %98, %99 : vector<8x128xf32>
    %101 = vector.broadcast %90 : vector<1x128xf32> to vector<8x128xf32>
    %102 = arith.addf %100, %101 : vector<8x128xf32>
    %c0_42 = arith.constant 0 : index
    %c0_43 = arith.constant 0 : index
    %103 = vector.load %arg10[%c0_42, %c0_43] : memref<128x128xf32, #tpu.memory_space<vmem>>, vector<128x128xf32>
    %cst_44 = arith.constant dense<0.000000e+00> : vector<8x128xf32>
    %104 = tpu.matmul %102, %103, %cst_44 {dimension_numbers = #tpu.dot_dimension_numbers<[1], [0], [0], [1], [0, 0, 1, 1], [], []>} : vector<8x128xf32>, vector<128x128xf32>, vector<8x128xf32> -> vector<8x128xf32>
    %105 = arith.addf %104, %30 : vector<8x128xf32>
    %106 = vector.extract_strided_slice %1 {offsets = [11, 0], sizes = [1, 128], strides = [1, 1]} : vector<15x128xf32> to vector<1x128xf32>
    %107 = vector.broadcast %106 : vector<1x128xf32> to vector<8x128xf32>
    %108 = arith.addf %105, %107 : vector<8x128xf32>
    %cst_45 = arith.constant 5.000000e-01 : f32
    %109 = vector.broadcast %cst_45 : f32 to vector<8x128xf32>
    %110 = arith.mulf %109, %108 : vector<8x128xf32>
    %cst_46 = arith.constant 4.471500e-02 : f32
    %111 = vector.broadcast %cst_46 : f32 to vector<8x128xf32>
    %112 = arith.mulf %111, %108 : vector<8x128xf32>
    %113 = arith.mulf %112, %108 : vector<8x128xf32>
    %114 = arith.mulf %113, %108 : vector<8x128xf32>
    %115 = arith.addf %108, %114 : vector<8x128xf32>
    %cst_47 = arith.constant 0.797884583 : f32
    %116 = vector.broadcast %cst_47 : f32 to vector<8x128xf32>
    %117 = arith.mulf %116, %115 : vector<8x128xf32>
    %118 = math.tanh %117 : vector<8x128xf32>
    %cst_48 = arith.constant 1.000000e+00 : f32
    %119 = vector.broadcast %cst_48 : f32 to vector<8x128xf32>
    %120 = arith.addf %119, %118 : vector<8x128xf32>
    %121 = arith.mulf %110, %120 : vector<8x128xf32>
    %c0_49 = arith.constant 0 : index
    %c0_50 = arith.constant 0 : index
    %122 = vector.load %arg11[%c0_49, %c0_50] : memref<128x32xf32, #tpu.memory_space<vmem>>, vector<128x32xf32>
    %cst_51 = arith.constant dense<0.000000e+00> : vector<8x32xf32>
    %123 = tpu.matmul %121, %122, %cst_51 {dimension_numbers = #tpu.dot_dimension_numbers<[1], [0], [0], [1], [0, 0, 1, 1], [], []>} : vector<8x128xf32>, vector<128x32xf32>, vector<8x32xf32> -> vector<8x32xf32>
    %124 = vector.extract_strided_slice %1 {offsets = [12, 0], sizes = [1, 32], strides = [1, 1]} : vector<15x128xf32> to vector<1x32xf32>
    %125 = vector.broadcast %124 : vector<1x32xf32> to vector<8x32xf32>
    %126 = arith.addf %123, %125 : vector<8x32xf32>
    %127 = vector.extract_strided_slice %1 {offsets = [13, 0], sizes = [1, 32], strides = [1, 1]} : vector<15x128xf32> to vector<1x32xf32>
    %128 = vector.broadcast %127 : vector<1x32xf32> to vector<8x32xf32>
    %129 = arith.subf %126, %128 : vector<8x32xf32>
    %130 = vector.extract_strided_slice %1 {offsets = [14, 0], sizes = [1, 32], strides = [1, 1]} : vector<15x128xf32> to vector<1x32xf32>
    %131 = vector.broadcast %130 : vector<1x32xf32> to vector<8x32xf32>
    %132 = arith.mulf %129, %131 : vector<8x32xf32>
    %133 = arith.mulf %132, %23 : vector<8x32xf32>
    %134 = arith.addf %133, %18 : vector<8x32xf32>
    %135 = tpu.transpose %134, [1, 0] : vector<8x32xf32> -> vector<32x8xf32>
    %c0_52 = arith.constant 0 : index
    %c0_53 = arith.constant 0 : index
    %136 = vector.load %arg12[%c0_52, %c0_53] : memref<32x8xf32, #tpu.memory_space<vmem>>, vector<32x8xf32>
    tpu.vector_store %arg12[%c0_52, %c0_53], %135 {strides = array<i32>} : memref<32x8xf32, #tpu.memory_space<vmem>>, vector<32x8xf32>,
    return
  }
  func.func @transform_0(%arg0: i32) -> (i32, i32) {
    %c0_i32 = arith.constant 0 : i32
    %c0_i32_0 = arith.constant 0 : i32
    return %arg0, %c0_i32 : i32, i32
  }
  func.func @transform_1(%arg0: i32) -> (i32, i32) {
    %c0_i32 = arith.constant 0 : i32
    %c0_i32_0 = arith.constant 0 : i32
    %c0_i32_1 = arith.constant 0 : i32
    return %c0_i32, %c0_i32_0 : i32, i32
  }
  func.func @transform_2(%arg0: i32) -> (i32, i32) {
    %c0_i32 = arith.constant 0 : i32
    %c0_i32_0 = arith.constant 0 : i32
    %c0_i32_1 = arith.constant 0 : i32
    return %c0_i32, %c0_i32_0 : i32, i32
  }
  func.func @transform_3(%arg0: i32) -> (i32, i32) {
    %c0_i32 = arith.constant 0 : i32
    %c0_i32_0 = arith.constant 0 : i32
    %c0_i32_1 = arith.constant 0 : i32
    return %c0_i32, %c0_i32_0 : i32, i32
  }
  func.func @transform_4(%arg0: i32) -> (i32, i32) {
    %c0_i32 = arith.constant 0 : i32
    %c0_i32_0 = arith.constant 0 : i32
    %c0_i32_1 = arith.constant 0 : i32
    return %c0_i32, %c0_i32_0 : i32, i32
  }
  func.func @transform_5(%arg0: i32) -> (i32, i32) {
    %c0_i32 = arith.constant 0 : i32
    %c0_i32_0 = arith.constant 0 : i32
    %c0_i32_1 = arith.constant 0 : i32
    return %c0_i32, %c0_i32_0 : i32, i32
  }
  func.func @transform_6(%arg0: i32) -> (i32, i32, i32) {
    %c0_i32 = arith.constant 0 : i32
    %c0_i32_0 = arith.constant 0 : i32
    %c0_i32_1 = arith.constant 0 : i32
    %c0_i32_2 = arith.constant 0 : i32
    return %c0_i32, %c0_i32_0, %c0_i32_1 : i32, i32, i32
  }
  func.func @transform_7(%arg0: i32) -> (i32, i32, i32) {
    %c0_i32 = arith.constant 0 : i32
    %c0_i32_0 = arith.constant 0 : i32
    %c0_i32_1 = arith.constant 0 : i32
    %c0_i32_2 = arith.constant 0 : i32
    return %c0_i32, %c0_i32_0, %c0_i32_1 : i32, i32, i32
  }
  func.func @transform_8(%arg0: i32) -> (i32, i32, i32) {
    %c0_i32 = arith.constant 0 : i32
    %c0_i32_0 = arith.constant 0 : i32
    %c0_i32_1 = arith.constant 0 : i32
    %c0_i32_2 = arith.constant 0 : i32
    return %c0_i32, %c0_i32_0, %c0_i32_1 : i32, i32, i32
  }
  func.func @transform_9(%arg0: i32) -> (i32, i32) {
    %c0_i32 = arith.constant 0 : i32
    %c0_i32_0 = arith.constant 0 : i32
    %c0_i32_1 = arith.constant 0 : i32
    return %c0_i32, %c0_i32_0 : i32, i32
  }
  func.func @transform_10(%arg0: i32) -> (i32, i32) {
    %c0_i32 = arith.constant 0 : i32
    %c0_i32_0 = arith.constant 0 : i32
    %c0_i32_1 = arith.constant 0 : i32
    return %c0_i32, %c0_i32_0 : i32, i32
  }
  func.func @transform_11(%arg0: i32) -> (i32, i32) {
    %c0_i32 = arith.constant 0 : i32
    %c0_i32_0 = arith.constant 0 : i32
    return %c0_i32, %arg0 : i32, i32
  }
}

</mosaic_0001>

<llo_original>
// kernel: tpu_custom_call.1
$region0: #{tpu_custom_call.1}
  #allocation0 [shape = 'u32[]', space=smem, size = 0x4, offset = 0x4, fixed_abs, tag = 'smem constant byte address 0x4 - core index']
  #allocation1 [shape = 'u32[72,128]{1,0:T(1,128)}', space=vmem, size = 0x9000, scoped, tag = 'internal scratch']
  %s0 = inlined_call_operand.hbm [shape: f32[8,32], index: 0, kind: input, shape index: {}]
  %s1 = inlined_call_operand.hbm [shape: f32[15,128], index: 1, kind: input, shape index: {}]
  %s2 = inlined_call_operand.vmem [shape: f32[32,32], index: 2, kind: input, shape index: {}]
  %s3 = inlined_call_operand.hbm [shape: f32[32,32], index: 3, kind: input, shape index: {}]
  %s4 = inlined_call_operand.vmem [shape: f32[128,128], index: 4, kind: input, shape index: {}]
  %s5 = inlined_call_operand.hbm [shape: f32[32,256], index: 5, kind: input, shape index: {}]
  %s6 = inlined_call_operand.hbm [shape: f32[1,128,128], index: 6, kind: input, shape index: {}]
  %s7 = inlined_call_operand.hbm [shape: f32[1,128,128], index: 7, kind: input, shape index: {}]
  %s8 = inlined_call_operand.hbm [shape: f32[1,128,128], index: 8, kind: input, shape index: {}]
  %s9 = inlined_call_operand.hbm [shape: f32[128,128], index: 9, kind: input, shape index: {}]
  %s10 = inlined_call_operand.vmem [shape: f32[128,32], index: 10, kind: input, shape index: {}]
  %s11 = inlined_call_operand.vmem [shape: f32[32,8], index: 11, kind: output, shape index: {}]
  %s12 = sld [smem:[#allocation0]]
  $region86: #{tpu_custom_call.1} parent=0
    _
  %s14 = ssub.s32 1, %s12
  %s15 = scalar_select 0, %s14, %s12
  $region1: #{tpu_custom_call.1} parent=0
    #allocation2 [shape = 'u8[4096]{0}', space=vmem, size = 0x1000, scoped, tag = 'input window, operand 0, single buffered']
    #allocation3 [shape = 's32[1]{0}', space=sflag, size = 0x4, scoped, tag = 'scoped memory for tpu_custom_call.1']
    #allocation4 [shape = 'u8[8192]{0}', space=vmem, size = 0x2000, scoped, tag = 'input window, operand 1, single buffered']
    #allocation5 [shape = 's32[1]{0}', space=sflag, size = 0x4, scoped, tag = 'scoped memory for tpu_custom_call.1']
    #allocation6 [shape = 'u8[16384]{0}', space=vmem, size = 0x4000, scoped, tag = 'input window, operand 3, single buffered']
    #allocation7 [shape = 'u8[32768]{0}', space=vmem, size = 0x8000, scoped, tag = 'input window, operand 5, single buffered']
    #allocation8 [shape = 's32[1]{0}', space=sflag, size = 0x4, scoped, tag = 'scoped memory for tpu_custom_call.1']
    #allocation9 [shape = 'u8[65536]{0}', space=vmem, size = 0x10000, scoped, tag = 'input window, operand 6, single buffered']
    #allocation10 [shape = 'u8[65536]{0}', space=vmem, size = 0x10000, scoped, tag = 'input window, operand 7, single buffered']
    #allocation11 [shape = 's32[1]{0}', space=sflag, size = 0x4, scoped, tag = 'scoped memory for tpu_custom_call.1']
    #allocation12 [shape = 'u8[65536]{0}', space=vmem, size = 0x10000, scoped, tag = 'input window, operand 8, single buffered']
    #allocation13 [shape = 'u8[65536]{0}', space=vmem, size = 0x10000, scoped, tag = 'input window, operand 9, single buffered']
    #allocation14 [shape = 's32[1]{0}', space=sflag, size = 0x4, scoped, tag = 'scoped memory for tpu_custom_call.1']
    %16 = vsyncpa [#allocation3], 0
    %17 = vsyncpa [#allocation5], 0
    %18 = vsyncpa [#allocation8], 0
    %19 = vsyncpa [#allocation11], 0
    %20 = vsyncpa [#allocation14], 0
    // Predicated region
    $region2: #{tpu_custom_call.1} parent=1 // pred_check
      _
    $region3: #{tpu_custom_call.1} parent=1 // pred_check_branch
      %22 = sbr.rel (0) target = $region5
    $region4: #{tpu_custom_call.1} parent=1 // pred_region
      %24 = vsyncadd [#allocation3], 0
      %s26 = sshll.u32 %s0, 4
      %s27 = int_to_ptr.hbm [resolvable:$true] %s26
      %s28 = sshll.u32 [#allocation2], 4
      %s29 = int_to_ptr.vmem [resolvable:$true] %s28
      %31 = dma.hbm_to_vmem [thread:$0]  %s27, 128, %s29, [#allocation3]
    $region5: #{tpu_custom_call.1} parent=1 // pred_fallthru
      _
    // Predicated region
    $region6: #{tpu_custom_call.1} parent=1 // pred_check
      _
    $region7: #{tpu_custom_call.1} parent=1 // pred_check_branch
      %33 = sbr.rel (0) target = $region9
    $region8: #{tpu_custom_call.1} parent=1 // pred_region
      %35 = vsyncadd [#allocation5], 0
      %s36 = sshll.u32 %s1, 4
      %s37 = int_to_ptr.hbm [resolvable:$true] %s36
      %s38 = sshll.u32 [#allocation4], 4
      %s39 = int_to_ptr.vmem [resolvable:$true] %s38
      %44 = dma.hbm_to_vmem [thread:$0]  %s37, 256, %s39, [#allocation5], 128, 128, 8
    $region9: #{tpu_custom_call.1} parent=1 // pred_fallthru
      _
    // Predicated region
    $region10: #{tpu_custom_call.1} parent=1 // pred_check
      _
    $region11: #{tpu_custom_call.1} parent=1 // pred_check_branch
      %46 = sbr.rel (0) target = $region13
    $region12: #{tpu_custom_call.1} parent=1 // pred_region
      _
    $region13: #{tpu_custom_call.1} parent=1 // pred_fallthru
      _
    // Predicated region
    $region14: #{tpu_custom_call.1} parent=1 // pred_check
      _
    $region15: #{tpu_custom_call.1} parent=1 // pred_check_branch
      %48 = sbr.rel (0) target = $region17
    $region16: #{tpu_custom_call.1} parent=1 // pred_region
      %50 = vsyncadd [#allocation5], 0
      %s51 = sshll.u32 %s3, 4
      %s52 = int_to_ptr.hbm [resolvable:$true] %s51
      %s53 = sshll.u32 [#allocation6], 4
      %s54 = int_to_ptr.vmem [resolvable:$true] %s53
      %59 = dma.hbm_to_vmem [thread:$0]  %s52, 512, %s54, [#allocation5], 128, 128, 8
    $region17: #{tpu_custom_call.1} parent=1 // pred_fallthru
      _
    // Predicated region
    $region18: #{tpu_custom_call.1} parent=1 // pred_check
      _
    $region19: #{tpu_custom_call.1} parent=1 // pred_check_branch
      %61 = sbr.rel (0) target = $region21
    $region20: #{tpu_custom_call.1} parent=1 // pred_region
      _
    $region21: #{tpu_custom_call.1} parent=1 // pred_fallthru
      _
    // Predicated region
    $region22: #{tpu_custom_call.1} parent=1 // pred_check
      _
    $region23: #{tpu_custom_call.1} parent=1 // pred_check_branch
      %63 = sbr.rel (0) target = $region25
    $region24: #{tpu_custom_call.1} parent=1 // pred_region
      %65 = vsyncadd [#allocation8], 0
      %s66 = sshll.u32 %s5, 4
      %s67 = int_to_ptr.hbm [resolvable:$true] %s66
      %s68 = sshll.u32 [#allocation7], 4
      %s69 = int_to_ptr.vmem [resolvable:$true] %s68
      %74 = dma.hbm_to_vmem [thread:$0]  %s67, 1024, %s69, [#allocation8], 256, 256, 16
    $region25: #{tpu_custom_call.1} parent=1 // pred_fallthru
      _
    // Predicated region
    $region26: #{tpu_custom_call.1} parent=1 // pred_check
      _
    $region27: #{tpu_custom_call.1} parent=1 // pred_check_branch
      %76 = sbr.rel (0) target = $region29
    $region28: #{tpu_custom_call.1} parent=1 // pred_region
      %78 = vsyncadd [#allocation8], 0
      %s79 = sshll.u32 %s6, 4
      %s80 = int_to_ptr.hbm [resolvable:$true] %s79
      %s81 = sshll.u32 [#allocation9], 4
      %s82 = int_to_ptr.vmem [resolvable:$true] %s81
      %87 = dma.hbm_to_vmem [thread:$0]  %s80, 2048, %s82, [#allocation8], 128, 128, 8
    $region29: #{tpu_custom_call.1} parent=1 // pred_fallthru
      _
    // Predicated region
    $region30: #{tpu_custom_call.1} parent=1 // pred_check
      _
    $region31: #{tpu_custom_call.1} parent=1 // pred_check_branch
      %89 = sbr.rel (0) target = $region33
    $region32: #{tpu_custom_call.1} parent=1 // pred_region
      %91 = vsyncadd [#allocation11], 0
      %s92 = sshll.u32 %s7, 4
      %s93 = int_to_ptr.hbm [resolvable:$true] %s92
      %s94 = sshll.u32 [#allocation10], 4
      %s95 = int_to_ptr.vmem [resolvable:$true] %s94
      %100 = dma.hbm_to_vmem [thread:$0]  %s93, 2048, %s95, [#allocation11], 128, 128, 8
    $region33: #{tpu_custom_call.1} parent=1 // pred_fallthru
      _
    // Predicated region
    $region34: #{tpu_custom_call.1} parent=1 // pred_check
      _
    $region35: #{tpu_custom_call.1} parent=1 // pred_check_branch
      %102 = sbr.rel (0) target = $region37
    $region36: #{tpu_custom_call.1} parent=1 // pred_region
      %104 = vsyncadd [#allocation11], 0
      %s105 = sshll.u32 %s8, 4
      %s106 = int_to_ptr.hbm [resolvable:$true] %s105
      %s107 = sshll.u32 [#allocation12], 4
      %s108 = int_to_ptr.vmem [resolvable:$true] %s107
      %113 = dma.hbm_to_vmem [thread:$0]  %s106, 2048, %s108, [#allocation11], 128, 128, 8
    $region37: #{tpu_custom_call.1} parent=1 // pred_fallthru
      _
    // Predicated region
    $region38: #{tpu_custom_call.1} parent=1 // pred_check
      _
    $region39: #{tpu_custom_call.1} parent=1 // pred_check_branch
      %115 = sbr.rel (0) target = $region41
    $region40: #{tpu_custom_call.1} parent=1 // pred_region
      %117 = vsyncadd [#allocation14], 0
      %s118 = sshll.u32 %s9, 4
      %s119 = int_to_ptr.hbm [resolvable:$true] %s118
      %s120 = sshll.u32 [#allocation13], 4
      %s121 = int_to_ptr.vmem [resolvable:$true] %s120
      %126 = dma.hbm_to_vmem [thread:$0]  %s119, 2048, %s121, [#allocation14], 128, 128, 8
    $region41: #{tpu_custom_call.1} parent=1 // pred_fallthru
      _
    // Predicated region
    $region42: #{tpu_custom_call.1} parent=1 // pred_check
      _
    $region43: #{tpu_custom_call.1} parent=1 // pred_check_branch
      %128 = sbr.rel (0) target = $region45
    $region44: #{tpu_custom_call.1} parent=1 // pred_region
      _
    $region45: #{tpu_custom_call.1} parent=1 // pred_fallthru
      _
    // Predicated region
    $region46: #{tpu_custom_call.1} parent=1 // pred_check
      _
    $region47: #{tpu_custom_call.1} parent=1 // pred_check_branch
      %130 = sbr.rel (0) target = $region49
    $region48: #{tpu_custom_call.1} parent=1 // pred_region
      %132 = dma.done [#allocation3], 128
    $region49: #{tpu_custom_call.1} parent=1 // pred_fallthru
      _
    // Predicated region
    $region50: #{tpu_custom_call.1} parent=1 // pred_check
      _
    $region51: #{tpu_custom_call.1} parent=1 // pred_check_branch
      %134 = sbr.rel (0) target = $region53
    $region52: #{tpu_custom_call.1} parent=1 // pred_region
      %136 = dma.done [#allocation5], 256
    $region53: #{tpu_custom_call.1} parent=1 // pred_fallthru
      _
    // Predicated region
    $region54: #{tpu_custom_call.1} parent=1 // pred_check
      _
    $region55: #{tpu_custom_call.1} parent=1 // pred_check_branch
      %138 = sbr.rel (0) target = $region57
    $region56: #{tpu_custom_call.1} parent=1 // pred_region
      %140 = dma.done [#allocation5], 512
    $region57: #{tpu_custom_call.1} parent=1 // pred_fallthru
      _
    // Predicated region
    $region58: #{tpu_custom_call.1} parent=1 // pred_check
      _
    $region59: #{tpu_custom_call.1} parent=1 // pred_check_branch
      %142 = sbr.rel (0) target = $region61
    $region60: #{tpu_custom_call.1} parent=1 // pred_region
      %144 = dma.done [#allocation8], 1024
    $region61: #{tpu_custom_call.1} parent=1 // pred_fallthru
      _
    // Predicated region
    $region62: #{tpu_custom_call.1} parent=1 // pred_check
      _
    $region63: #{tpu_custom_call.1} parent=1 // pred_check_branch
      %146 = sbr.rel (0) target = $region65
    $region64: #{tpu_custom_call.1} parent=1 // pred_region
      %148 = dma.done [#allocation8], 2048
    $region65: #{tpu_custom_call.1} parent=1 // pred_fallthru
      _
    // Predicated region
    $region66: #{tpu_custom_call.1} parent=1 // pred_check
      _
    $region67: #{tpu_custom_call.1} parent=1 // pred_check_branch
      %150 = sbr.rel (0) target = $region69
    $region68: #{tpu_custom_call.1} parent=1 // pred_region
      %152 = dma.done [#allocation11], 2048
    $region69: #{tpu_custom_call.1} parent=1 // pred_fallthru
      _
    // Predicated region
    $region70: #{tpu_custom_call.1} parent=1 // pred_check
      _
    $region71: #{tpu_custom_call.1} parent=1 // pred_check_branch
      %154 = sbr.rel (0) target = $region73
    $region72: #{tpu_custom_call.1} parent=1 // pred_region
      %156 = dma.done [#allocation11], 2048
    $region73: #{tpu_custom_call.1} parent=1 // pred_fallthru
      _
    // Predicated region
    $region74: #{tpu_custom_call.1} parent=1 // pred_check
      _
    $region75: #{tpu_custom_call.1} parent=1 // pred_check_branch
      %158 = sbr.rel (0) target = $region77
    $region76: #{tpu_custom_call.1} parent=1 // pred_region
      %160 = dma.done [#allocation14], 2048
    $region77: #{tpu_custom_call.1} parent=1 // pred_fallthru
      _
    %v161 = vld [vmem:[#allocation2] sm:$0xff]
    %v162 = vld [vmem:[#allocation4] sm:$0xff]
    %v163 = vld [vmem:[#allocation4 + $0x8] sm:$0x7f]
    %v164 = vld [vmem:[%s2] sm:$0xff]
    %v165 = vld [vmem:[%s2 + $0x8] sm:$0xff]
    %v166 = vld [vmem:[%s2 + $0x10] sm:$0xff]
    %v167 = vld [vmem:[%s2 + $0x18] sm:$0xff]
    %vm168 = vcmask 261120
    %v170 = vsel %vm168, %v161, 0
    %172 = vmatpush.msra.mxu0 0.0
    %173 = vmatpush.msra.mxu0 0.0
    %174 = vmatpush.msra.mxu0 0.0
    %175 = vmatpush.msra.mxu0 0.0
    %176 = vmatpush.msra.mxu0 0.0
    %177 = vmatpush.msra.mxu0 0.0
    %178 = vmatpush.msra.mxu0 0.0
    %179 = vmatpush.msra.mxu0 0.0
    %180 = vmatpush.msra.mxu0 0.0
    %181 = vmatpush.msra.mxu0 0.0
    %182 = vmatpush.msra.mxu0 0.0
    %183 = vmatpush.msra.mxu0 0.0
    %184 = vmatpush.msra.mxu0 %v167
    %185 = vmatpush.msra.mxu0 %v166
    %186 = vmatpush.msra.mxu0 %v165
    %187 = vmatpush.msra.mxu0 %v164
    %188 = vmatmul.f32.gmra.mxu0 %v170
    %v189 = vpop.f32.mrf.mxu0
    %v190 = vadd.f32 0.0, %v189
    %191 = vdwg.mxu0
    %v192 = vsub.f32 %v161, %v190
    %v193 = vmul.f32 %v192, %v192
    %v195 = vsel %vm168, %v193, 0
    %197 = vmatpush.msra.mxu0 0.0
    %198 = vmatpush.msra.mxu0 0.0
    %199 = vmatpush.msra.mxu0 0.0
    %200 = vmatpush.msra.mxu0 0.0
    %201 = vmatpush.msra.mxu0 0.0
    %202 = vmatpush.msra.mxu0 0.0
    %203 = vmatpush.msra.mxu0 0.0
    %204 = vmatpush.msra.mxu0 0.0
    %205 = vmatpush.msra.mxu0 0.0
    %206 = vmatpush.msra.mxu0 0.0
    %207 = vmatpush.msra.mxu0 0.0
    %208 = vmatpush.msra.mxu0 0.0
    %209 = vmatpush.msra.mxu0 %v167
    %210 = vmatpush.msra.mxu0 %v166
    %211 = vmatpush.msra.mxu0 %v165
    %212 = vmatpush.msra.mxu0 %v164
    %213 = vmatmul.f32.gmra.mxu0 %v195
    %v214 = vpop.f32.mrf.mxu0
    %v215 = vadd.f32 1e-05, %v214
    %216 = vdwg.mxu0
    %v217 = vrsqrt.pop %v215
    %v218 = vmul.f32 %v217, %v215
    %v219 = vmul.f32 %v218, %v217
    %v220 = vmul.f32 0.5, %v219
    %v221 = vsub.f32 1.5, %v220
    %v222 = vmul.f32 %v217, %v221
    %vm223 = vweird.f32 %v215
    %vm224 = vweird.f32 %v217
    %vm225 = vmor %vm223, %vm224
    %v226 = vsel %vm225, %v217, %v222
    %v227 = vmul.f32 %v192, %v226
    %v228 = vperm.slane %v162, 0
    %v229 = vmul.f32 %v227, %v228
    %v230 = vperm.slane %v162, 1
    %v231 = vadd.f32 %v229, %v230
    %v232 = vld [vmem:[#allocation6] sm:$0xff]
    %v233 = vld [vmem:[#allocation6 + $0x8] sm:$0xff]
    %v234 = vld [vmem:[#allocation6 + $0x10] sm:$0xff]
    %v235 = vld [vmem:[#allocation6 + $0x18] sm:$0xff]
    %236 = vmatpush.msra.mxu0 0.0
    %237 = vmatpush.msra.mxu0 0.0
    %238 = vmatpush.msra.mxu0 0.0
    %239 = vmatpush.msra.mxu0 0.0
    %240 = vmatpush.msra.mxu0 0.0
    %241 = vmatpush.msra.mxu0 0.0
    %242 = vmatpush.msra.mxu0 0.0
    %243 = vmatpush.msra.mxu0 0.0
    %244 = vmatpush.msra.mxu0 0.0
    %245 = vmatpush.msra.mxu0 0.0
    %246 = vmatpush.msra.mxu0 0.0
    %247 = vmatpush.msra.mxu0 0.0
    %248 = vmatpush.msra.mxu0 %v235
    %249 = vmatpush.msra.mxu0 %v234
    %250 = vmatpush.msra.mxu0 %v233
    %251 = vmatpush.msra.mxu0 %v232
    %252 = vmatmul.f32.gmra.mxu0 %v170
    %v253 = vpop.f32.mrf.mxu0
    %v254 = vadd.f32 0.0, %v253
    %255 = vdwg.mxu0
    %256 = vmatpush.msra.mxu0 0.0
    %257 = vmatpush.msra.mxu0 0.0
    %258 = vmatpush.msra.mxu0 0.0
    %259 = vmatpush.msra.mxu0 0.0
    %260 = vmatpush.msra.mxu0 0.0
    %261 = vmatpush.msra.mxu0 0.0
    %262 = vmatpush.msra.mxu0 0.0
    %263 = vmatpush.msra.mxu0 0.0
    %264 = vmatpush.msra.mxu0 0.0
    %265 = vmatpush.msra.mxu0 0.0
    %266 = vmatpush.msra.mxu0 0.0
    %267 = vmatpush.msra.mxu0 0.0
    %268 = vmatpush.msra.mxu0 %v235
    %269 = vmatpush.msra.mxu0 %v234
    %270 = vmatpush.msra.mxu0 %v233
    %271 = vmatpush.msra.mxu0 %v232
    %272 = vmatmul.f32.gmra.mxu0 %v195
    %v273 = vpop.f32.mrf.mxu0
    %v274 = vadd.f32 1e-05, %v273
    %275 = vdwg.mxu0
    %v276 = vrsqrt.pop %v274
    %v277 = vmul.f32 %v276, %v274
    %v278 = vmul.f32 %v277, %v276
    %v279 = vmul.f32 0.5, %v278
    %v280 = vsub.f32 1.5, %v279
    %v281 = vmul.f32 %v276, %v280
    %v282 = vmul.f32 %v274, %v281
    %vm283 = vcmp.eq.f32.partialorder %v274, inf
    %v284 = vsel %vm283, %v274, %v282
    %vm285 = vcmp.eq.f32.partialorder %v274, 0.0
    %v286 = vand.u32 %v274, 2147483648
    %v287 = vsel %vm285, %v286, %v284
    %v288 = vld [vmem:[#allocation7] sm:$0xff]
    %v289 = vld [vmem:[#allocation7 + $0x8] sm:$0xff]
    %v290 = vld [vmem:[#allocation7 + $0x10] sm:$0xff]
    %v291 = vld [vmem:[#allocation7 + $0x18] sm:$0xff]
    %v292 = vld [vmem:[#allocation7 + $0x20] sm:$0xff]
    %v293 = vld [vmem:[#allocation7 + $0x28] sm:$0xff]
    %v294 = vld [vmem:[#allocation7 + $0x30] sm:$0xff]
    %v295 = vld [vmem:[#allocation7 + $0x38] sm:$0xff]
    %v297 = vsel %vm168, %v231, 0
    %299 = vmatpush.msra.mxu0 0.0
    %300 = vmatpush.msra.mxu0 0.0
    %301 = vmatpush.msra.mxu0 0.0
    %302 = vmatpush.msra.mxu0 0.0
    %303 = vmatpush.msra.mxu0 0.0
    %304 = vmatpush.msra.mxu0 0.0
    %305 = vmatpush.msra.mxu0 0.0
    %306 = vmatpush.msra.mxu0 0.0
    %307 = vmatpush.msra.mxu0 0.0
    %308 = vmatpush.msra.mxu0 0.0
    %309 = vmatpush.msra.mxu0 0.0
    %310 = vmatpush.msra.mxu0 0.0
    %311 = vmatpush.msra.mxu0 %v294
    %312 = vmatpush.msra.mxu0 %v292
    %313 = vmatpush.msra.mxu0 %v290
    %314 = vmatpush.msra.mxu0 %v288
    %315 = vmatmul.f32.gmra.mxu0 %v297
    %v316 = vpop.f32.mrf.mxu0
    %v317 = vadd.f32 0.0, %v316
    %318 = vdwg.mxu0
    %319 = vmatpush.msra.mxu0 0.0
    %320 = vmatpush.msra.mxu0 0.0
    %321 = vmatpush.msra.mxu0 0.0
    %322 = vmatpush.msra.mxu0 0.0
    %323 = vmatpush.msra.mxu0 0.0
    %324 = vmatpush.msra.mxu0 0.0
    %325 = vmatpush.msra.mxu0 0.0
    %326 = vmatpush.msra.mxu0 0.0
    %327 = vmatpush.msra.mxu0 0.0
    %328 = vmatpush.msra.mxu0 0.0
    %329 = vmatpush.msra.mxu0 0.0
    %330 = vmatpush.msra.mxu0 0.0
    %331 = vmatpush.msra.mxu0 %v295
    %332 = vmatpush.msra.mxu0 %v293
    %333 = vmatpush.msra.mxu0 %v291
    %334 = vmatpush.msra.mxu0 %v289
    %335 = vmatmul.f32.gmra.mxu0 %v297
    %v336 = vpop.f32.mrf.mxu0
    %v337 = vadd.f32 0.0, %v336
    %338 = vdwg.mxu0
    %v339 = vperm.slane %v162, 2
    %v340 = vadd.f32 %v317, %v339
    %v341 = vld [vmem:[%s4] sm:$0xff]
    %v342 = vld [vmem:[%s4 + $0x8] sm:$0xff]
    %v343 = vld [vmem:[%s4 + $0x10] sm:$0xff]
    %v344 = vld [vmem:[%s4 + $0x18] sm:$0xff]
    %v345 = vld [vmem:[%s4 + $0x20] sm:$0xff]
    %v346 = vld [vmem:[%s4 + $0x28] sm:$0xff]
    %v347 = vld [vmem:[%s4 + $0x30] sm:$0xff]
    %v348 = vld [vmem:[%s4 + $0x38] sm:$0xff]
    %v349 = vld [vmem:[%s4 + $0x40] sm:$0xff]
    %v350 = vld [vmem:[%s4 + $0x48] sm:$0xff]
    %v351 = vld [vmem:[%s4 + $0x50] sm:$0xff]
    %v352 = vld [vmem:[%s4 + $0x58] sm:$0xff]
    %v353 = vld [vmem:[%s4 + $0x60] sm:$0xff]
    %v354 = vld [vmem:[%s4 + $0x68] sm:$0xff]
    %v355 = vld [vmem:[%s4 + $0x70] sm:$0xff]
    %v356 = vld [vmem:[%s4 + $0x78] sm:$0xff]
    %v357 = vld [vmem:[#allocation9] sm:$0xff]
    %v358 = vld [vmem:[#allocation9 + $0x8] sm:$0xff]
    %v359 = vld [vmem:[#allocation9 + $0x10] sm:$0xff]
    %v360 = vld [vmem:[#allocation9 + $0x18] sm:$0xff]
    %v361 = vld [vmem:[#allocation9 + $0x20] sm:$0xff]
    %v362 = vld [vmem:[#allocation9 + $0x28] sm:$0xff]
    %v363 = vld [vmem:[#allocation9 + $0x30] sm:$0xff]
    %v364 = vld [vmem:[#allocation9 + $0x38] sm:$0xff]
    %v365 = vld [vmem:[#allocation9 + $0x40] sm:$0xff]
    %v366 = vld [vmem:[#allocation9 + $0x48] sm:$0xff]
    %v367 = vld [vmem:[#allocation9 + $0x50] sm:$0xff]
    %v368 = vld [vmem:[#allocation9 + $0x58] sm:$0xff]
    %v369 = vld [vmem:[#allocation9 + $0x60] sm:$0xff]
    %v370 = vld [vmem:[#allocation9 + $0x68] sm:$0xff]
    %v371 = vld [vmem:[#allocation9 + $0x70] sm:$0xff]
    %v372 = vld [vmem:[#allocation9 + $0x78] sm:$0xff]
    %373 = vmatpush.msra.mxu0 %v372
    %374 = vmatpush.msra.mxu0 %v371
    %375 = vmatpush.msra.mxu0 %v370
    %376 = vmatpush.msra.mxu0 %v369
    %377 = vmatpush.msra.mxu0 %v368
    %378 = vmatpush.msra.mxu0 %v367
    %379 = vmatpush.msra.mxu0 %v366
    %380 = vmatpush.msra.mxu0 %v365
    %381 = vmatpush.msra.mxu0 %v364
    %382 = vmatpush.msra.mxu0 %v363
    %383 = vmatpush.msra.mxu0 %v362
    %384 = vmatpush.msra.mxu0 %v361
    %385 = vmatpush.msra.mxu0 %v360
    %386 = vmatpush.msra.mxu0 %v359
    %387 = vmatpush.msra.mxu0 %v358
    %388 = vmatpush.msra.mxu0 %v357
    %389 = vmatmul.f32.gmra.mxu0 %v340
    %v390 = vpop.f32.mrf.mxu0
    %v391 = vadd.f32 0.0, %v390
    %392 = vdwg.mxu0
    %393 = vmatpush.msra.mxu0 %v356
    %394 = vmatpush.msra.mxu0 %v355
    %395 = vmatpush.msra.mxu0 %v354
    %396 = vmatpush.msra.mxu0 %v353
    %397 = vmatpush.msra.mxu0 %v352
    %398 = vmatpush.msra.mxu0 %v351
    %399 = vmatpush.msra.mxu0 %v350
    %400 = vmatpush.msra.mxu0 %v349
    %401 = vmatpush.msra.mxu0 %v348
    %402 = vmatpush.msra.mxu0 %v347
    %403 = vmatpush.msra.mxu0 %v346
    %404 = vmatpush.msra.mxu0 %v345
    %405 = vmatpush.msra.mxu0 %v344
    %406 = vmatpush.msra.mxu0 %v343
    %407 = vmatpush.msra.mxu0 %v342
    %408 = vmatpush.msra.mxu0 %v341
    %409 = vmatmul.f32.gmra.mxu0 %v391
    %v410 = vpop.f32.mrf.mxu0
    %v411 = vadd.f32 0.0, %v410
    %412 = vdwg.mxu0
    %v413 = vsub.f32 %v391, %v411
    %v414 = vmul.f32 %v413, %v413
    %415 = vmatpush.msra.mxu0 %v356
    %416 = vmatpush.msra.mxu0 %v355
    %417 = vmatpush.msra.mxu0 %v354
    %418 = vmatpush.msra.mxu0 %v353
    %419 = vmatpush.msra.mxu0 %v352
    %420 = vmatpush.msra.mxu0 %v351
    %421 = vmatpush.msra.mxu0 %v350
    %422 = vmatpush.msra.mxu0 %v349
    %423 = vmatpush.msra.mxu0 %v348
    %424 = vmatpush.msra.mxu0 %v347
    %425 = vmatpush.msra.mxu0 %v346
    %426 = vmatpush.msra.mxu0 %v345
    %427 = vmatpush.msra.mxu0 %v344
    %428 = vmatpush.msra.mxu0 %v343
    %429 = vmatpush.msra.mxu0 %v342
    %430 = vmatpush.msra.mxu0 %v341
    %431 = vmatmul.f32.gmra.mxu0 %v414
    %v432 = vpop.f32.mrf.mxu0
    %v433 = vadd.f32 1e-05, %v432
    %434 = vdwg.mxu0
    %v435 = vrsqrt.pop %v433
    %v436 = vmul.f32 %v435, %v433
    %v437 = vmul.f32 %v436, %v435
    %v438 = vmul.f32 0.5, %v437
    %v439 = vsub.f32 1.5, %v438
    %v440 = vmul.f32 %v435, %v439
    %vm441 = vweird.f32 %v433
    %vm442 = vweird.f32 %v435
    %vm443 = vmor %vm441, %vm442
    %v444 = vsel %vm443, %v435, %v440
    %v445 = vmul.f32 %v413, %v444
    %v446 = vperm.slane %v162, 3
    %v447 = vmul.f32 %v445, %v446
    %v448 = vperm.slane %v162, 4
    %v449 = vadd.f32 %v447, %v448
    %v450 = vld [vmem:[#allocation10] sm:$0xff]
    %v451 = vld [vmem:[#allocation10 + $0x8] sm:$0xff]
    %v452 = vld [vmem:[#allocation10 + $0x10] sm:$0xff]
    %v453 = vld [vmem:[#allocation10 + $0x18] sm:$0xff]
    %v454 = vld [vmem:[#allocation10 + $0x20] sm:$0xff]
    %v455 = vld [vmem:[#allocation10 + $0x28] sm:$0xff]
    %v456 = vld [vmem:[#allocation10 + $0x30] sm:$0xff]
    %v457 = vld [vmem:[#allocation10 + $0x38] sm:$0xff]
    %v458 = vld [vmem:[#allocation10 + $0x40] sm:$0xff]
    %v459 = vld [vmem:[#allocation10 + $0x48] sm:$0xff]
    %v460 = vld [vmem:[#allocation10 + $0x50] sm:$0xff]
    %v461 = vld [vmem:[#allocation10 + $0x58] sm:$0xff]
    %v462 = vld [vmem:[#allocation10 + $0x60] sm:$0xff]
    %v463 = vld [vmem:[#allocation10 + $0x68] sm:$0xff]
    %v464 = vld [vmem:[#allocation10 + $0x70] sm:$0xff]
    %v465 = vld [vmem:[#allocation10 + $0x78] sm:$0xff]
    %v466 = vperm.slane %v162, 5
    %467 = vmatpush.msra.mxu0 %v465
    %468 = vmatpush.msra.mxu0 %v464
    %469 = vmatpush.msra.mxu0 %v463
    %470 = vmatpush.msra.mxu0 %v462
    %471 = vmatpush.msra.mxu0 %v461
    %472 = vmatpush.msra.mxu0 %v460
    %473 = vmatpush.msra.mxu0 %v459
    %474 = vmatpush.msra.mxu0 %v458
    %475 = vmatpush.msra.mxu0 %v457
    %476 = vmatpush.msra.mxu0 %v456
    %477 = vmatpush.msra.mxu0 %v455
    %478 = vmatpush.msra.mxu0 %v454
    %479 = vmatpush.msra.mxu0 %v453
    %480 = vmatpush.msra.mxu0 %v452
    %481 = vmatpush.msra.mxu0 %v451
    %482 = vmatpush.msra.mxu0 %v450
    %483 = vmatmul.f32.gmra.mxu0 %v449
    %v484 = vpop.f32.mrf.mxu0
    %v485 = vadd.f32 %v466, %v484
    %486 = vdwg.mxu0
    %v487 = vmul.f32 %v485, 0.5
    %v488 = vmul.f32 %v485, 0.044715
    %v489 = vmul.f32 %v488, %v485
    %v490 = vmul.f32 %v489, %v485
    %v491 = vadd.f32 %v485, %v490
    %v492 = vmul.f32 %v491, 0.7978846
    %v493 = vtanh.pop %v492
    %v494 = vadd.f32 %v493, 1.0
    %v495 = vmul.f32 %v487, %v494
    %v496 = vld [vmem:[#allocation12] sm:$0xff]
    %v497 = vld [vmem:[#allocation12 + $0x8] sm:$0xff]
    %v498 = vld [vmem:[#allocation12 + $0x10] sm:$0xff]
    %v499 = vld [vmem:[#allocation12 + $0x18] sm:$0xff]
    %v500 = vld [vmem:[#allocation12 + $0x20] sm:$0xff]
    %v501 = vld [vmem:[#allocation12 + $0x28] sm:$0xff]
    %v502 = vld [vmem:[#allocation12 + $0x30] sm:$0xff]
    %v503 = vld [vmem:[#allocation12 + $0x38] sm:$0xff]
    %v504 = vld [vmem:[#allocation12 + $0x40] sm:$0xff]
    %v505 = vld [vmem:[#allocation12 + $0x48] sm:$0xff]
    %v506 = vld [vmem:[#allocation12 + $0x50] sm:$0xff]
    %v507 = vld [vmem:[#allocation12 + $0x58] sm:$0xff]
    %v508 = vld [vmem:[#allocation12 + $0x60] sm:$0xff]
    %v509 = vld [vmem:[#allocation12 + $0x68] sm:$0xff]
    %v510 = vld [vmem:[#allocation12 + $0x70] sm:$0xff]
    %v511 = vld [vmem:[#allocation12 + $0x78] sm:$0xff]
    %512 = vmatpush.msra.mxu0 %v511
    %513 = vmatpush.msra.mxu0 %v510
    %514 = vmatpush.msra.mxu0 %v509
    %515 = vmatpush.msra.mxu0 %v508
    %516 = vmatpush.msra.mxu0 %v507
    %517 = vmatpush.msra.mxu0 %v506
    %518 = vmatpush.msra.mxu0 %v505
    %519 = vmatpush.msra.mxu0 %v504
    %520 = vmatpush.msra.mxu0 %v503
    %521 = vmatpush.msra.mxu0 %v502
    %522 = vmatpush.msra.mxu0 %v501
    %523 = vmatpush.msra.mxu0 %v500
    %524 = vmatpush.msra.mxu0 %v499
    %525 = vmatpush.msra.mxu0 %v498
    %526 = vmatpush.msra.mxu0 %v497
    %527 = vmatpush.msra.mxu0 %v496
    %528 = vmatmul.f32.gmra.mxu0 %v495
    %v529 = vpop.f32.mrf.mxu0
    %v530 = vadd.f32 0.0, %v529
    %531 = vdwg.mxu0
    %v532 = vadd.f32 %v449, %v530
    %v533 = vperm.slane %v162, 6
    %v534 = vadd.f32 %v532, %v533
    %535 = vmatpush.msra.mxu0 %v356
    %536 = vmatpush.msra.mxu0 %v355
    %537 = vmatpush.msra.mxu0 %v354
    %538 = vmatpush.msra.mxu0 %v353
    %539 = vmatpush.msra.mxu0 %v352
    %540 = vmatpush.msra.mxu0 %v351
    %541 = vmatpush.msra.mxu0 %v350
    %542 = vmatpush.msra.mxu0 %v349
    %543 = vmatpush.msra.mxu0 %v348
    %544 = vmatpush.msra.mxu0 %v347
    %545 = vmatpush.msra.mxu0 %v346
    %546 = vmatpush.msra.mxu0 %v345
    %547 = vmatpush.msra.mxu0 %v344
    %548 = vmatpush.msra.mxu0 %v343
    %549 = vmatpush.msra.mxu0 %v342
    %550 = vmatpush.msra.mxu0 %v341
    %551 = vmatmul.f32.gmra.mxu0 %v534
    %v552 = vpop.f32.mrf.mxu0
    %v553 = vadd.f32 0.0, %v552
    %554 = vdwg.mxu0
    %v555 = vsub.f32 %v534, %v553
    %v556 = vmul.f32 %v555, %v555
    %557 = vmatpush.msra.mxu0 %v356
    %558 = vmatpush.msra.mxu0 %v355
    %559 = vmatpush.msra.mxu0 %v354
    %560 = vmatpush.msra.mxu0 %v353
    %561 = vmatpush.msra.mxu0 %v352
    %562 = vmatpush.msra.mxu0 %v351
    %563 = vmatpush.msra.mxu0 %v350
    %564 = vmatpush.msra.mxu0 %v349
    %565 = vmatpush.msra.mxu0 %v348
    %566 = vmatpush.msra.mxu0 %v347
    %567 = vmatpush.msra.mxu0 %v346
    %568 = vmatpush.msra.mxu0 %v345
    %569 = vmatpush.msra.mxu0 %v344
    %570 = vmatpush.msra.mxu0 %v343
    %571 = vmatpush.msra.mxu0 %v342
    %572 = vmatpush.msra.mxu0 %v341
    %573 = vmatmul.f32.gmra.mxu0 %v556
    %v574 = vpop.f32.mrf.mxu0
    %v575 = vadd.f32 1e-05, %v574
    %576 = vdwg.mxu0
    %v577 = vrsqrt.pop %v575
    %v578 = vmul.f32 %v577, %v575
    %v579 = vmul.f32 %v578, %v577
    %v580 = vmul.f32 0.5, %v579
    %v581 = vsub.f32 1.5, %v580
    %v582 = vmul.f32 %v577, %v581
    %vm583 = vweird.f32 %v575
    %vm584 = vweird.f32 %v577
    %vm585 = vmor %vm583, %vm584
    %v586 = vsel %vm585, %v577, %v582
    %v587 = vmul.f32 %v555, %v586
    %v588 = vperm.slane %v162, 7
    %v589 = vmul.f32 %v587, %v588
    %v590 = vperm.slane %v163, 0
    %v591 = vadd.f32 %v589, %v590
    %592 = vmatpush.msra.mxu0 %v356
    %593 = vmatpush.msra.mxu0 %v355
    %594 = vmatpush.msra.mxu0 %v354
    %595 = vmatpush.msra.mxu0 %v353
    %596 = vmatpush.msra.mxu0 %v352
    %597 = vmatpush.msra.mxu0 %v351
    %598 = vmatpush.msra.mxu0 %v350
    %599 = vmatpush.msra.mxu0 %v349
    %600 = vmatpush.msra.mxu0 %v348
    %601 = vmatpush.msra.mxu0 %v347
    %602 = vmatpush.msra.mxu0 %v346
    %603 = vmatpush.msra.mxu0 %v345
    %604 = vmatpush.msra.mxu0 %v344
    %605 = vmatpush.msra.mxu0 %v343
    %606 = vmatpush.msra.mxu0 %v342
    %607 = vmatpush.msra.mxu0 %v341
    %608 = vmatmul.f32.gmra.mxu0 %v591
    %v609 = vpop.f32.mrf.mxu0
    %v610 = vadd.f32 0.0, %v609
    %611 = vdwg.mxu0
    %v612 = vsub.f32 %v591, %v610
    %v613 = vmul.f32 %v612, %v612
    %614 = vmatpush.msra.mxu0 %v356
    %615 = vmatpush.msra.mxu0 %v355
    %616 = vmatpush.msra.mxu0 %v354
    %617 = vmatpush.msra.mxu0 %v353
    %618 = vmatpush.msra.mxu0 %v352
    %619 = vmatpush.msra.mxu0 %v351
    %620 = vmatpush.msra.mxu0 %v350
    %621 = vmatpush.msra.mxu0 %v349
    %622 = vmatpush.msra.mxu0 %v348
    %623 = vmatpush.msra.mxu0 %v347
    %624 = vmatpush.msra.mxu0 %v346
    %625 = vmatpush.msra.mxu0 %v345
    %626 = vmatpush.msra.mxu0 %v344
    %627 = vmatpush.msra.mxu0 %v343
    %628 = vmatpush.msra.mxu0 %v342
    %629 = vmatpush.msra.mxu0 %v341
    %630 = vmatmul.f32.gmra.mxu0 %v613
    %v631 = vpop.f32.mrf.mxu0
    %v632 = vadd.f32 1e-05, %v631
    %633 = vdwg.mxu0
    %v634 = vrsqrt.pop %v632
    %v635 = vmul.f32 %v634, %v632
    %v636 = vmul.f32 %v635, %v634
    %v637 = vmul.f32 0.5, %v636
    %v638 = vsub.f32 1.5, %v637
    %v639 = vmul.f32 %v634, %v638
    %vm640 = vweird.f32 %v632
    %vm641 = vweird.f32 %v634
    %vm642 = vmor %vm640, %vm641
    %v643 = vsel %vm642, %v634, %v639
    %v644 = vmul.f32 %v612, %v643
    %v645 = vperm.slane %v163, 1
    %v646 = vmul.f32 %v644, %v645
    %v647 = vperm.slane %v163, 2
    %v648 = vadd.f32 %v646, %v647
    %v649 = vld [vmem:[#allocation13] sm:$0xff]
    %v650 = vld [vmem:[#allocation13 + $0x8] sm:$0xff]
    %v651 = vld [vmem:[#allocation13 + $0x10] sm:$0xff]
    %v652 = vld [vmem:[#allocation13 + $0x18] sm:$0xff]
    %v653 = vld [vmem:[#allocation13 + $0x20] sm:$0xff]
    %v654 = vld [vmem:[#allocation13 + $0x28] sm:$0xff]
    %v655 = vld [vmem:[#allocation13 + $0x30] sm:$0xff]
    %v656 = vld [vmem:[#allocation13 + $0x38] sm:$0xff]
    %v657 = vld [vmem:[#allocation13 + $0x40] sm:$0xff]
    %v658 = vld [vmem:[#allocation13 + $0x48] sm:$0xff]
    %v659 = vld [vmem:[#allocation13 + $0x50] sm:$0xff]
    %v660 = vld [vmem:[#allocation13 + $0x58] sm:$0xff]
    %v661 = vld [vmem:[#allocation13 + $0x60] sm:$0xff]
    %v662 = vld [vmem:[#allocation13 + $0x68] sm:$0xff]
    %v663 = vld [vmem:[#allocation13 + $0x70] sm:$0xff]
    %v664 = vld [vmem:[#allocation13 + $0x78] sm:$0xff]
    %665 = vmatpush.msra.mxu0 %v664
    %666 = vmatpush.msra.mxu0 %v663
    %667 = vmatpush.msra.mxu0 %v662
    %668 = vmatpush.msra.mxu0 %v661
    %669 = vmatpush.msra.mxu0 %v660
    %670 = vmatpush.msra.mxu0 %v659
    %671 = vmatpush.msra.mxu0 %v658
    %672 = vmatpush.msra.mxu0 %v657
    %673 = vmatpush.msra.mxu0 %v656
    %674 = vmatpush.msra.mxu0 %v655
    %675 = vmatpush.msra.mxu0 %v654
    %676 = vmatpush.msra.mxu0 %v653
    %677 = vmatpush.msra.mxu0 %v652
    %678 = vmatpush.msra.mxu0 %v651
    %679 = vmatpush.msra.mxu0 %v650
    %680 = vmatpush.msra.mxu0 %v649
    %681 = vmatmul.f32.gmra.mxu0 %v648
    %v682 = vpop.f32.mrf.mxu0
    %v683 = vadd.f32 %v337, %v682
    %684 = vdwg.mxu0
    %v685 = vperm.slane %v163, 3
    %v686 = vadd.f32 %v683, %v685
    %v687 = vmul.f32 %v686, 0.5
    %v688 = vmul.f32 %v686, 0.044715
    %v689 = vmul.f32 %v688, %v686
    %v690 = vmul.f32 %v689, %v686
    %v691 = vadd.f32 %v686, %v690
    %v692 = vmul.f32 %v691, 0.7978846
    %v693 = vtanh.pop %v692
    %v694 = vadd.f32 %v693, 1.0
    %v695 = vmul.f32 %v687, %v694
    %v696 = vld [vmem:[%s10] sm:$0xff]
    %v697 = vld [vmem:[%s10 + $0x8] sm:$0xff]
    %v698 = vld [vmem:[%s10 + $0x10] sm:$0xff]
    %v699 = vld [vmem:[%s10 + $0x18] sm:$0xff]
    %v700 = vld [vmem:[%s10 + $0x20] sm:$0xff]
    %v701 = vld [vmem:[%s10 + $0x28] sm:$0xff]
    %v702 = vld [vmem:[%s10 + $0x30] sm:$0xff]
    %v703 = vld [vmem:[%s10 + $0x38] sm:$0xff]
    %v704 = vld [vmem:[%s10 + $0x40] sm:$0xff]
    %v705 = vld [vmem:[%s10 + $0x48] sm:$0xff]
    %v706 = vld [vmem:[%s10 + $0x50] sm:$0xff]
    %v707 = vld [vmem:[%s10 + $0x58] sm:$0xff]
    %v708 = vld [vmem:[%s10 + $0x60] sm:$0xff]
    %v709 = vld [vmem:[%s10 + $0x68] sm:$0xff]
    %v710 = vld [vmem:[%s10 + $0x70] sm:$0xff]
    %v711 = vld [vmem:[%s10 + $0x78] sm:$0xff]
    %v712 = vperm.slane %v163, 4
    %713 = vmatpush.msra.mxu0 %v711
    %714 = vmatpush.msra.mxu0 %v710
    %715 = vmatpush.msra.mxu0 %v709
    %716 = vmatpush.msra.mxu0 %v708
    %717 = vmatpush.msra.mxu0 %v707
    %718 = vmatpush.msra.mxu0 %v706
    %719 = vmatpush.msra.mxu0 %v705
    %720 = vmatpush.msra.mxu0 %v704
    %721 = vmatpush.msra.mxu0 %v703
    %722 = vmatpush.msra.mxu0 %v702
    %723 = vmatpush.msra.mxu0 %v701
    %724 = vmatpush.msra.mxu0 %v700
    %725 = vmatpush.msra.mxu0 %v699
    %726 = vmatpush.msra.mxu0 %v698
    %727 = vmatpush.msra.mxu0 %v697
    %728 = vmatpush.msra.mxu0 %v696
    %729 = vmatmul.f32.gmra.mxu0 %v695
    %v730 = vpop.f32.mrf.mxu0
    %v731 = vadd.f32 %v712, %v730
    %732 = vdwg.mxu0
    %v733 = vperm.slane %v163, 5
    %v734 = vsub.f32 %v731, %v733
    %v735 = vperm.slane %v163, 6
    %v736 = vmul.f32 %v734, %v735
    %v737 = vmul.f32 %v736, %v287
    %v738 = vadd.f32 %v737, %v254
    %739 = vxpose.xlu0.b32.start [1/16] %v738, 128
    %740 = vxpose.xlu0.b32.cont [2/16] 0.0, 128
    %741 = vxpose.xlu0.b32.cont [3/16] 0.0, 128
    %742 = vxpose.xlu0.b32.cont [4/16] 0.0, 128
    %743 = vxpose.xlu0.b32.cont [5/16] 0.0, 128
    %744 = vxpose.xlu0.b32.cont [6/16] 0.0, 128
    %745 = vxpose.xlu0.b32.cont [7/16] 0.0, 128
    %746 = vxpose.xlu0.b32.cont [8/16] 0.0, 128
    %747 = vxpose.xlu0.b32.cont [9/16] 0.0, 128
    %748 = vxpose.xlu0.b32.cont [10/16] 0.0, 128
    %749 = vxpose.xlu0.b32.cont [11/16] 0.0, 128
    %750 = vxpose.xlu0.b32.cont [12/16] 0.0, 128
    %751 = vxpose.xlu0.b32.cont [13/16] 0.0, 128
    %752 = vxpose.xlu0.b32.cont [14/16] 0.0, 128
    %753 = vxpose.xlu0.b32.cont [15/16] 0.0, 128
    %754 = vxpose.xlu0.b32.end [16/16] 0.0, 128
    %v755 = vpop.trf.xlu0
    %v756 = vpop.trf.xlu0
    %v757 = vpop.trf.xlu0
    %v758 = vpop.trf.xlu0
    %v759 = vpop.trf.xlu0
    %v760 = vpop.trf.xlu0
    %v761 = vpop.trf.xlu0
    %v762 = vpop.trf.xlu0
    %v763 = vpop.trf.xlu0
    %v764 = vpop.trf.xlu0
    %v765 = vpop.trf.xlu0
    %v766 = vpop.trf.xlu0
    %v767 = vpop.trf.xlu0
    %v768 = vpop.trf.xlu0
    %v769 = vpop.trf.xlu0
    %v770 = vpop.trf.xlu0
    %vm771 = vcmask 64512
    %772 = vst.msk [vmem:[%s11] sm:$0xff] %vm771, %v755
    %773 = vst.msk [vmem:[%s11 + $0x8] sm:$0xff] %vm771, %v756
    %774 = vst.msk [vmem:[%s11 + $0x10] sm:$0xff] %vm771, %v757
    %775 = vst.msk [vmem:[%s11 + $0x18] sm:$0xff] %vm771, %v758
    // Predicated region
    $region78: #{tpu_custom_call.1} parent=1 // pred_check
      _
    $region79: #{tpu_custom_call.1} parent=1 // pred_check_branch
      %777 = sbr.rel (0) target = $region81
    $region80: #{tpu_custom_call.1} parent=1 // pred_region
      _
    $region81: #{tpu_custom_call.1} parent=1 // pred_fallthru
      _
    // Predicated region
    $region82: #{tpu_custom_call.1} parent=1 // pred_check
      _
    $region83: #{tpu_custom_call.1} parent=1 // pred_check_branch
      %779 = sbr.rel (0) target = $region85
    $region84: #{tpu_custom_call.1} parent=1 // pred_region
      _
    $region85: #{tpu_custom_call.1} parent=1 // pred_fallthru
      _
    %780 = vsyncpa [#allocation3], 1
    %781 = vsyncpa [#allocation5], 1
    %782 = vsyncpa [#allocation8], 1
    %783 = vsyncpa [#allocation11], 1
    %784 = vsyncpa [#allocation14], 1

</llo_original>
